<compile_context>
chip_gen: v7x
topology: tpu7x:2x2x1
jax: 0.10.0
libtpu: 0.0.40
codegen_flags: <defaults>
</compile_context>

<pallas_src>
import jax
import jax.numpy as jnp
from jax.experimental import pallas as pl
from jax.experimental.pallas import tpu as pltpu  # noqa: F401  (memory-space helpers if extended)

BN_EPS = 1e-5
DROPOUT_P = 0.1
INV_KEEP = 1.0 / (1.0 - DROPOUT_P)
# keep element iff uint32 bits >= p * 2^32  ->  P(keep) = 1 - p
DROP_THRESH = int(DROPOUT_P * (1 << 32))  # 429496729


def mlp_block_kernel(x_ref, wt_ref, bgb_ref, rbits_ref, o_ref):
    # ---- Linear: (B, In) @ (In, OutP) + bias  -> (B, OutP) on the MXU ----
    h = jnp.dot(x_ref[...], wt_ref[...], preferred_element_type=jnp.float32)
    h = h + bgb_ref[0:1, :]                                   # bias row (1, OutP)

    # ---- ReLU (VPU) ----
    h = jnp.maximum(h, 0.0)

    # ---- BatchNorm1d (training): batch stats, var = E[h^2] - mean^2 ----
    mean = jnp.mean(h, axis=0, keepdims=True)                 # (1, OutP)
    mean_sq = jnp.mean(h * h, axis=0, keepdims=True)          # (1, OutP)
    var = mean_sq - mean * mean

    inv_std = jax.lax.rsqrt(var + BN_EPS)                     # EUP
    gamma = bgb_ref[1:2, :]
    beta = bgb_ref[2:3, :]
    s_bn = gamma * inv_std                                    # (1, OutP)
    # fold dropout rescale 1/(1-p) into the per-feature affine
    s = s_bn * INV_KEEP
    t = (beta - mean * s_bn) * INV_KEEP
    y = h * s + t                                             # one mul + one add / elem

    # ---- Dropout: integer-threshold compare on raw uint32 bits ----
    keep = rbits_ref[...] >= jnp.uint32(DROP_THRESH)
    o_ref[...] = jnp.where(keep, y, 0.0)


def _pad_last(a, target):
    pad = [(0, 0)] * a.ndim
    pad[-1] = (0, target - a.shape[-1])
    return jnp.pad(a, pad)


def prepare_params(weight, bias, gamma, beta):
    """One-time parameter prep (outside the per-call path).

    weight: (Out, In); bias/gamma/beta: (Out,)
    Returns wt_pad: (In, OutP) and bgb: (3, OutP) with OutP = next multiple of 128.
    """
    out_f, _ = weight.shape
    out_p = ((out_f + 127) // 128) * 128
    w_pad = jnp.pad(weight, ((0, out_p - out_f), (0, 0)))     # (OutP, In)
    wt_pad = jnp.asarray(w_pad.T, dtype=jnp.float32)          # (In, OutP), transposed ONCE
    bgb = jnp.stack(
        [
            _pad_last(bias.astype(jnp.float32), out_p),
            _pad_last(gamma.astype(jnp.float32), out_p),
            _pad_last(beta.astype(jnp.float32), out_p),
        ],
        axis=0,
    )                                                         # (3, OutP)
    return wt_pad, bgb


@jax.jit
def mlp_block(x, wt_pad, bgb, rbits):
    """x: (B, In) f32; wt_pad: (In, OutP) f32; bgb: (3, OutP) f32; rbits: (B, OutP) uint32."""
    B, in_f = x.shape
    out_p = wt_pad.shape[1]

    return pl.pallas_call(
        mlp_block_kernel,
        out_shape=jax.ShapeDtypeStruct((B, out_p), jnp.float32),
        grid=(1,),
        in_specs=[
            pl.BlockSpec((B, in_f), lambda i: (0, 0)),
            pl.BlockSpec((in_f, out_p), lambda i: (0, 0)),
            pl.BlockSpec((3, out_p), lambda i: (0, 0)),
            pl.BlockSpec((B, out_p), lambda i: (0, 0)),
        ],
        out_specs=pl.BlockSpec((B, out_p), lambda i: (0, 0)),
    )(x, wt_pad, bgb, rbits)


if __name__ == "__main__":
    # Small shapes consistent with the module: batch=8, in_features=32, out_features=64.
    B, IN_F, OUT_F = 8, 32, 64
    OUT_P = ((OUT_F + 127) // 128) * 128                      # 128: lane-dense output

    key = jax.random.PRNGKey(0)
    kx, kw, kb, kd = jax.random.split(key, 4)

    x = jax.random.normal(kx, (B, IN_F), dtype=jnp.float32)

    # PyTorch nn.Linear default init: U(-1/sqrt(in), 1/sqrt(in))
    bound = 1.0 / (IN_F ** 0.5)
    weight = jax.random.uniform(kw, (OUT_F, IN_F), jnp.float32, -bound, bound)
    bias = jax.random.uniform(kb, (OUT_F,), jnp.float32, -bound, bound)
    # BatchNorm1d defaults: gamma = 1, beta = 0
    gamma = jnp.ones((OUT_F,), jnp.float32)
    beta = jnp.zeros((OUT_F,), jnp.float32)

    # One-time parameter prep (pad + transpose happen here, not per forward call).
    wt_pad, bgb = prepare_params(weight, bias, gamma, beta)

    # Dropout randomness: raw uint32 bits, compared against an integer threshold in-kernel.
    rbits = jax.random.bits(kd, (B, OUT_P), dtype=jnp.uint32)

    out_padded = mlp_block(x, wt_pad, bgb, rbits)
    jax.block_until_ready(out_padded)

    out = out_padded[:, :OUT_F]
    assert out.shape == (B, OUT_F) and out.dtype == jnp.float32
    assert bool(jnp.all(jnp.isfinite(out)))
    print("KERNEL_OK")
</pallas_src>

<mosaic_0001>
module attributes {stable_mosaic.version = 11 : i64} {
  func.func @mlp_block_kernel(%arg0: i32, %arg1: memref<8x32xf32, #tpu.memory_space<vmem>>, %arg2: memref<32x128xf32, #tpu.memory_space<vmem>>, %arg3: memref<3x128xf32, #tpu.memory_space<vmem>>, %arg4: memref<8x128xi32, #tpu.memory_space<vmem>>, %arg5: memref<8x128xf32, #tpu.memory_space<vmem>>) attributes {dimension_semantics = [#tpu.dimension_semantics<arbitrary>], iteration_bounds = array<i64: 1>, scalar_prefetch = 0 : i64, scratch_operands = 0 : i64, tpu.core_type = #tpu.core_type<tc>, window_params = [{pipeline_mode = #tpu.pipeline_mode<synchronous>, transform_indices = @transform_0, window_bounds = array<i64: 8, 32>}, {pipeline_mode = #tpu.pipeline_mode<synchronous>, transform_indices = @transform_1, window_bounds = array<i64: 32, 128>}, {pipeline_mode = #tpu.pipeline_mode<synchronous>, transform_indices = @transform_2, window_bounds = array<i64: 3, 128>}, {pipeline_mode = #tpu.pipeline_mode<synchronous>, transform_indices = @transform_3, window_bounds = array<i64: 8, 128>}, {pipeline_mode = #tpu.pipeline_mode<synchronous>, transform_indices = @transform_4, window_bounds = array<i64: 8, 128>}]} {
    %c0 = arith.constant 0 : index
    %c0_0 = arith.constant 0 : index
    %0 = vector.load %arg1[%c0, %c0_0] : memref<8x32xf32, #tpu.memory_space<vmem>>, vector<8x32xf32>
    %c0_1 = arith.constant 0 : index
    %c0_2 = arith.constant 0 : index
    %1 = vector.load %arg2[%c0_1, %c0_2] : memref<32x128xf32, #tpu.memory_space<vmem>>, vector<32x128xf32>
    %cst = arith.constant dense<0.000000e+00> : vector<8x128xf32>
    %2 = tpu.matmul %0, %1, %cst {dimension_numbers = #tpu.dot_dimension_numbers<[1], [0], [0], [1], [0, 0, 1, 1], [], []>} : vector<8x32xf32>, vector<32x128xf32>, vector<8x128xf32> -> vector<8x128xf32>
    %c0_3 = arith.constant 0 : index
    %c0_4 = arith.constant 0 : index
    %3 = vector.load %arg3[%c0_3, %c0_4] : memref<3x128xf32, #tpu.memory_space<vmem>>, vector<1x128xf32>
    %4 = vector.broadcast %3 : vector<1x128xf32> to vector<8x128xf32>
    %5 = arith.addf %2, %4 : vector<8x128xf32>
    %cst_5 = arith.constant 0.000000e+00 : f32
    %6 = vector.broadcast %cst_5 : f32 to vector<8x128xf32>
    %7 = arith.maximumf %5, %6 : vector<8x128xf32>
    %cst_6 = arith.constant dense<0.000000e+00> : vector<128xf32>
    %8 = vector.multi_reduction <add>, %7, %cst_6 [0] : vector<8x128xf32> to vector<128xf32>
    %9 = vector.shape_cast %8 : vector<128xf32> to vector<1x128xf32>
    %cst_7 = arith.constant 8.000000e+00 : f32
    %10 = vector.broadcast %cst_7 : f32 to vector<1x128xf32>
    %11 = arith.divf %9, %10 : vector<1x128xf32>
    %12 = arith.mulf %7, %7 : vector<8x128xf32>
    %cst_8 = arith.constant dense<0.000000e+00> : vector<128xf32>
    %13 = vector.multi_reduction <add>, %12, %cst_8 [0] : vector<8x128xf32> to vector<128xf32>
    %14 = vector.shape_cast %13 : vector<128xf32> to vector<1x128xf32>
    %cst_9 = arith.constant 8.000000e+00 : f32
    %15 = vector.broadcast %cst_9 : f32 to vector<1x128xf32>
    %16 = arith.divf %14, %15 : vector<1x128xf32>
    %17 = arith.mulf %11, %11 : vector<1x128xf32>
    %18 = arith.subf %16, %17 : vector<1x128xf32>
    %cst_10 = arith.constant 9.99999974E-6 : f32
    %19 = vector.broadcast %cst_10 : f32 to vector<1x128xf32>
    %20 = arith.addf %18, %19 : vector<1x128xf32>
    %21 = math.rsqrt %20 : vector<1x128xf32>
    %c1 = arith.constant 1 : index
    %c0_11 = arith.constant 0 : index
    %22 = vector.load %arg3[%c1, %c0_11] : memref<3x128xf32, #tpu.memory_space<vmem>>, vector<1x128xf32>
    %c2 = arith.constant 2 : index
    %c0_12 = arith.constant 0 : index
    %23 = vector.load %arg3[%c2, %c0_12] : memref<3x128xf32, #tpu.memory_space<vmem>>, vector<1x128xf32>
    %24 = arith.mulf %22, %21 : vector<1x128xf32>
    %cst_13 = arith.constant 1.11111116 : f32
    %25 = vector.broadcast %cst_13 : f32 to vector<1x128xf32>
    %26 = arith.mulf %24, %25 : vector<1x128xf32>
    %27 = arith.mulf %11, %24 : vector<1x128xf32>
    %28 = arith.subf %23, %27 : vector<1x128xf32>
    %cst_14 = arith.constant 1.11111116 : f32
    %29 = vector.broadcast %cst_14 : f32 to vector<1x128xf32>
    %30 = arith.mulf %28, %29 : vector<1x128xf32>
    %31 = vector.broadcast %26 : vector<1x128xf32> to vector<8x128xf32>
    %32 = arith.mulf %7, %31 : vector<8x128xf32>
    %33 = vector.broadcast %30 : vector<1x128xf32> to vector<8x128xf32>
    %34 = arith.addf %32, %33 : vector<8x128xf32>
    %c0_15 = arith.constant 0 : index
    %c0_16 = arith.constant 0 : index
    %35 = vector.load %arg4[%c0_15, %c0_16] : memref<8x128xi32, #tpu.memory_space<vmem>>, vector<8x128xi32>
    %c429496729_i32 = arith.constant 429496729 : i32
    %36 = vector.broadcast %c429496729_i32 : i32 to vector<8x128xi32>
    %37 = arith.cmpi uge, %35, %36 : vector<8x128xi32>
    %cst_17 = arith.constant 0.000000e+00 : f32
    %38 = vector.broadcast %cst_17 : f32 to vector<8x128xf32>
    %39 = arith.select %37, %34, %38 : vector<8x128xi1>, vector<8x128xf32>
    %c0_18 = arith.constant 0 : index
    %c0_19 = arith.constant 0 : index
    %40 = vector.load %arg5[%c0_18, %c0_19] : memref<8x128xf32, #tpu.memory_space<vmem>>, vector<8x128xf32>
    tpu.vector_store %arg5[%c0_18, %c0_19], %39 {strides = array<i32>} : memref<8x128xf32, #tpu.memory_space<vmem>>, vector<8x128xf32>,
    return
  }
  func.func @transform_0(%arg0: i32) -> (i32, i32) {
    %c0_i32 = arith.constant 0 : i32
    %c0_i32_0 = arith.constant 0 : i32
    %c0_i32_1 = arith.constant 0 : i32
    return %c0_i32, %c0_i32_0 : i32, i32
  }
  func.func @transform_1(%arg0: i32) -> (i32, i32) {
    %c0_i32 = arith.constant 0 : i32
    %c0_i32_0 = arith.constant 0 : i32
    %c0_i32_1 = arith.constant 0 : i32
    return %c0_i32, %c0_i32_0 : i32, i32
  }
  func.func @transform_2(%arg0: i32) -> (i32, i32) {
    %c0_i32 = arith.constant 0 : i32
    %c0_i32_0 = arith.constant 0 : i32
    %c0_i32_1 = arith.constant 0 : i32
    return %c0_i32, %c0_i32_0 : i32, i32
  }
  func.func @transform_3(%arg0: i32) -> (i32, i32) {
    %c0_i32 = arith.constant 0 : i32
    %c0_i32_0 = arith.constant 0 : i32
    %c0_i32_1 = arith.constant 0 : i32
    return %c0_i32, %c0_i32_0 : i32, i32
  }
  func.func @transform_4(%arg0: i32) -> (i32, i32) {
    %c0_i32 = arith.constant 0 : i32
    %c0_i32_0 = arith.constant 0 : i32
    %c0_i32_1 = arith.constant 0 : i32
    return %c0_i32, %c0_i32_0 : i32, i32
  }
}

</mosaic_0001>

<llo_original>
// kernel: mlp_block.1
$region0: #{mlp_block.1}
  #allocation0 [shape = 'u32[]', space=smem, size = 0x4, offset = 0x4, fixed_abs, tag = 'smem constant byte address 0x4 - core index']
  #allocation1 [shape = 'u32[144,128]{1,0:T(1,128)}', space=vmem, size = 0x12000, scoped, tag = 'internal scratch']
  %s0 = inlined_call_operand.hbm [shape: f32[8,32], index: 0, kind: input, shape index: {}]
  %s1 = inlined_call_operand.hbm [shape: f32[32,128], index: 1, kind: input, shape index: {}]
  %s2 = inlined_call_operand.hbm [shape: f32[3,128], index: 2, kind: input, shape index: {}]
  %s3 = inlined_call_operand.vmem [shape: u32[8,128], index: 3, kind: input, shape index: {}]
  %s4 = inlined_call_operand.hbm [shape: f32[8,128], index: 4, kind: output, shape index: {}]
  %s5 = sld [smem:[#allocation0]]
  $region38: #{mlp_block.1} parent=0
    _
  %s7 = ssub.s32 1, %s5
  %s8 = scalar_select 0, %s7, %s5
  $region1: #{mlp_block.1} parent=0
    #allocation2 [shape = 'u8[4096]{0}', space=vmem, size = 0x1000, scoped, tag = 'input window, operand 0, single buffered']
    #allocation3 [shape = 's32[1]{0}', space=sflag, size = 0x4, scoped, tag = 'scoped memory for mlp_block.1']
    #allocation4 [shape = 's32[1]{0}', space=sflag, size = 0x4, scoped, tag = 'scoped memory for mlp_block.1']
    #allocation5 [shape = 'u8[16384]{0}', space=vmem, size = 0x4000, scoped, tag = 'input window, operand 1, single buffered']
    #allocation6 [shape = 's32[1]{0}', space=sflag, size = 0x4, scoped, tag = 'scoped memory for mlp_block.1']
    #allocation7 [shape = 'u8[2048]{0}', space=vmem, size = 0x800, scoped, tag = 'input window, operand 2, single buffered']
    #allocation8 [shape = 'u8[4096]{0}', space=vmem, size = 0x1000, scoped, tag = 'output window, operand 0, single buffered']
    %9 = vsyncpa [#allocation3], 0
    %10 = vsyncpa [#allocation6], 0
    %11 = vsyncpa [#allocation4], 0
    // Predicated region
    $region2: #{mlp_block.1} parent=1 // pred_check
      _
    $region3: #{mlp_block.1} parent=1 // pred_check_branch
      %13 = sbr.rel (0) target = $region5
    $region4: #{mlp_block.1} parent=1 // pred_region
      %s15 = ssub.s32 128, 128
      %16 = vsyncadd [#allocation3], %s15
      %s18 = sshll.u32 [#allocation2], 4
      %s19 = int_to_ptr.vmem [resolvable:$true] %s18
      %21 = dma.hbm_to_vmem [thread:$0]  %s0, 128, %s19, [#allocation3]
    $region5: #{mlp_block.1} parent=1 // pred_fallthru
      _
    // Predicated region
    $region6: #{mlp_block.1} parent=1 // pred_check
      _
    $region7: #{mlp_block.1} parent=1 // pred_check_branch
      %23 = sbr.rel (0) target = $region9
    $region8: #{mlp_block.1} parent=1 // pred_region
      %s25 = ssub.s32 512, 512
      %26 = vsyncadd [#allocation6], %s25
      %s27 = sshll.u32 [#allocation5], 4
      %s28 = int_to_ptr.vmem [resolvable:$true] %s27
      %33 = dma.hbm_to_vmem [thread:$0]  %s1, 512, %s28, [#allocation6], 128, 128, 8
    $region9: #{mlp_block.1} parent=1 // pred_fallthru
      _
    // Predicated region
    $region10: #{mlp_block.1} parent=1 // pred_check
      _
    $region11: #{mlp_block.1} parent=1 // pred_check_branch
      %35 = sbr.rel (0) target = $region13
    $region12: #{mlp_block.1} parent=1 // pred_region
      %s37 = ssub.s32 64, 64
      %38 = vsyncadd [#allocation6], %s37
      %s40 = sshll.u32 [#allocation7], 4
      %s41 = int_to_ptr.vmem [resolvable:$true] %s40
      %43 = dma.hbm_to_vmem [thread:$0]  %s2, 64, %s41, [#allocation6]
    $region13: #{mlp_block.1} parent=1 // pred_fallthru
      _
    // Predicated region
    $region14: #{mlp_block.1} parent=1 // pred_check
      _
    $region15: #{mlp_block.1} parent=1 // pred_check_branch
      %45 = sbr.rel (0) target = $region17
    $region16: #{mlp_block.1} parent=1 // pred_region
      _
    $region17: #{mlp_block.1} parent=1 // pred_fallthru
      _
    // Predicated region
    $region18: #{mlp_block.1} parent=1 // pred_check
      _
    $region19: #{mlp_block.1} parent=1 // pred_check_branch
      %47 = sbr.rel (0) target = $region21
    $region20: #{mlp_block.1} parent=1 // pred_region
      %48 = dma.done [#allocation3], 128
    $region21: #{mlp_block.1} parent=1 // pred_fallthru
      _
    // Predicated region
    $region22: #{mlp_block.1} parent=1 // pred_check
      _
    $region23: #{mlp_block.1} parent=1 // pred_check_branch
      %50 = sbr.rel (0) target = $region25
    $region24: #{mlp_block.1} parent=1 // pred_region
      %51 = dma.done [#allocation6], 512
    $region25: #{mlp_block.1} parent=1 // pred_fallthru
      _
    // Predicated region
    $region26: #{mlp_block.1} parent=1 // pred_check
      _
    $region27: #{mlp_block.1} parent=1 // pred_check_branch
      %53 = sbr.rel (0) target = $region29
    $region28: #{mlp_block.1} parent=1 // pred_region
      %54 = dma.done [#allocation6], 64
    $region29: #{mlp_block.1} parent=1 // pred_fallthru
      _
    %v55 = vld [vmem:[#allocation2] sm:$0xff]
    %v56 = vld [vmem:[#allocation5] sm:$0xff]
    %v57 = vld [vmem:[#allocation5 + $0x8] sm:$0xff]
    %v58 = vld [vmem:[#allocation5 + $0x10] sm:$0xff]
    %v59 = vld [vmem:[#allocation5 + $0x18] sm:$0xff]
    %v60 = vld [vmem:[#allocation7] sm:$0x1]
    %v61 = vlaneseq
    %v62 = vshrl.u32 %v61, 7
    %v63 = vsub.s32 0, %v62
    %v64 = vrot.slane %v60, %v63
    %vm65 = vcmask 261120
    %v67 = vsel %vm65, %v55, 0
    %69 = vmatprep.subr.mxu0 0.0
    %70 = vmatpush1.msra.mxu0 %v56
    %71 = vmatprep.subr.mxu0 0.0
    %72 = vmatpush1.msra.mxu0 %v57
    %73 = vmatprep.subr.mxu0 0.0
    %74 = vmatpush1.msra.mxu0 %v58
    %75 = vmatprep.subr.mxu0 0.0
    %76 = vmatpush1.msra.mxu0 %v59
    %77 = vmatprep.subr.mxu0 0.0
    %78 = vmatpush1.msra.mxu0 0.0
    %79 = vmatprep.subr.mxu0 0.0
    %80 = vmatpush1.msra.mxu0 0.0
    %81 = vmatprep.subr.mxu0 0.0
    %82 = vmatpush1.msra.mxu0 0.0
    %83 = vmatprep.subr.mxu0 0.0
    %84 = vmatpush1.msra.mxu0 0.0
    %85 = vmatprep.subr.mxu0 0.0
    %86 = vmatpush1.msra.mxu0 0.0
    %87 = vmatprep.subr.mxu0 0.0
    %88 = vmatpush1.msra.mxu0 0.0
    %89 = vmatprep.subr.mxu0 0.0
    %90 = vmatpush1.msra.mxu0 0.0
    %91 = vmatprep.subr.mxu0 0.0
    %92 = vmatpush1.msra.mxu0 0.0
    %93 = vmatprep.subr.mxu0 0.0
    %94 = vmatpush1.msra.mxu0 0.0
    %95 = vmatprep.subr.mxu0 0.0
    %96 = vmatpush1.msra.mxu0 0.0
    %97 = vmatprep.subr.mxu0 0.0
    %98 = vmatpush1.msra.mxu0 0.0
    %99 = vmatprep.subr.mxu0 0.0
    %100 = vmatpush1.msra.mxu0 0.0
    %101 = vmatprep.subr.mxu0 0.0
    %102 = vmatpush1.msra.mxu0 0.0
    %103 = vmatprep.subr.mxu0 0.0
    %104 = vmatpush1.msra.mxu0 0.0
    %105 = vmatprep.subr.mxu0 0.0
    %106 = vmatpush1.msra.mxu0 0.0
    %107 = vmatprep.subr.mxu0 0.0
    %108 = vmatpush1.msra.mxu0 0.0
    %109 = vmatprep.subr.mxu0 0.0
    %110 = vmatpush1.msra.mxu0 0.0
    %111 = vmatprep.subr.mxu0 0.0
    %112 = vmatpush1.msra.mxu0 0.0
    %113 = vmatprep.subr.mxu0 0.0
    %114 = vmatpush1.msra.mxu0 0.0
    %115 = vmatprep.subr.mxu0 0.0
    %116 = vmatpush1.msra.mxu0 0.0
    %117 = vmatprep.subr.mxu0 0.0
    %118 = vmatpush1.msra.mxu0 0.0
    %119 = vmatprep.subr.mxu0 0.0
    %120 = vmatpush1.msra.mxu0 0.0
    %121 = vmatprep.subr.mxu0 0.0
    %122 = vmatpush1.msra.mxu0 0.0
    %123 = vmatprep.subr.mxu0 0.0
    %124 = vmatpush1.msra.mxu0 0.0
    %125 = vmatprep.subr.mxu0 0.0
    %126 = vmatpush1.msra.mxu0 0.0
    %127 = vmatprep.subr.mxu0 0.0
    %128 = vmatpush1.msra.mxu0 0.0
    %129 = vmatprep.subr.mxu0 0.0
    %130 = vmatpush1.msra.mxu0 0.0
    %131 = vmatprep.subr.mxu0 0.0
    %132 = vmatpush1.msra.mxu0 0.0
    %133 = vmatprep.mubr.f32.mxu0 0.0
    %134 = vmatmul.mubr.f32.gmra.mrb[0].mxu0 %v67
    %v135 = vpop.f32.mrb[0].mxu0
    %v136 = vadd.f32 %v64, %v135
    %v137 = vpop.f32.mrb[0].mxu0
    %138 = vdwg.mxu0
    %v139 = vmax.f32 %v136, 0.0
    %v140 = vrot.slane %v139, 4
    %v141 = vadd.f32 %v139, %v140
    %v142 = vrot.slane %v141, 2
    %v143 = vadd.f32 %v141, %v142
    %v144 = vrot.slane %v143, 1
    %v145 = vadd.f32 %v143, %v144
    %v146 = vrcp.pop 8.0
    %v147 = vmul.f32 %v145, %v146
    %v148 = vmul.f32 %v139, %v139
    %v149 = vrot.slane %v148, 4
    %v150 = vadd.f32 %v148, %v149
    %v151 = vrot.slane %v150, 2
    %v152 = vadd.f32 %v150, %v151
    %v153 = vrot.slane %v152, 1
    %v154 = vadd.f32 %v152, %v153
    %v155 = vmul.f32 %v154, %v146
    %v156 = vmul.f32 %v147, %v147
    %v157 = vsub.f32 %v155, %v156
    %v158 = vadd.f32 %v157, 1e-05
    %v159 = vrsqrt.pop %v158
    %v160 = vld [vmem:[#allocation7 + $0x1] sm:$0x1]
    %v161 = vld [vmem:[#allocation7 + $0x2] sm:$0x1]
    %v162 = vmul.f32 %v160, %v159
    %v163 = vmul.f32 %v162, 1.1111112
    %v164 = vmul.f32 %v147, %v162
    %v165 = vsub.f32 %v161, %v164
    %v166 = vmul.f32 %v165, 1.1111112
    %v167 = vlaneseq
    %v168 = vshrl.u32 %v167, 7
    %v169 = vsub.s32 0, %v168
    %v170 = vrot.slane %v163, %v169
    %v171 = vmul.f32 %v139, %v170
    %v172 = vlaneseq
    %v173 = vshrl.u32 %v172, 7
    %v174 = vsub.s32 0, %v173
    %v175 = vrot.slane %v166, %v174
    %v176 = vadd.f32 %v171, %v175
    %v177 = vld [vmem:[%s3] sm:$0xff]
    %vm178 = vcmp.ge.u32.totalorder %v177, 429496729
    %v179 = vsel %vm178, %v176, 0.0
    %180 = vst [vmem:[#allocation8] sm:$0xff] %v179
    // Predicated region
    $region30: #{mlp_block.1} parent=1 // pred_check
      _
    $region31: #{mlp_block.1} parent=1 // pred_check_branch
      %182 = sbr.rel (0) target = $region33
    $region32: #{mlp_block.1} parent=1 // pred_region
      %s184 = ssub.s32 128, 128
      %185 = vsyncadd [#allocation4], %s184
      %s187 = sshll.u32 [#allocation8], 4
      %s188 = int_to_ptr.vmem [resolvable:$true] %s187
      %190 = dma.vmem_to_hbm [thread:$0]  %s188, 128, %s4, [#allocation4]
    $region33: #{mlp_block.1} parent=1 // pred_fallthru
      _
    // Predicated region
    $region34: #{mlp_block.1} parent=1 // pred_check
      _
    $region35: #{mlp_block.1} parent=1 // pred_check_branch
      %192 = sbr.rel (0) target = $region37
    $region36: #{mlp_block.1} parent=1 // pred_region
      %193 = dma.done [#allocation4], 128
    $region37: #{mlp_block.1} parent=1 // pred_fallthru
      _
    %194 = vsyncpa [#allocation3], 1
    %195 = vsyncpa [#allocation6], 1
    %196 = vsyncpa [#allocation4], 1

</llo_original>
